<compile_context>
chip_gen: v5e
topology: v5e:2x2
jax: 0.10.0
libtpu: 0.0.40
codegen_flags: <defaults>
</compile_context>

<pallas_src>
import math

import jax
import jax.numpy as jnp
from jax.experimental import pallas as pl
from jax.experimental.pallas import tpu as pltpu


def _cdiv(a, b):
    return -(-a // b)


def _round_up(a, b):
    return _cdiv(a, b) * b


# ---------------------------------------------------------------------------
# Kernel: one (tm, tn) -> (tn, tm) tile transpose (XLU) per grid step.
# Refs are 2-D: the size-1 batch block dim is squeezed via `None`.
# ---------------------------------------------------------------------------
def _transpose_kernel(x_ref, o_ref):
    o_ref[...] = x_ref[...].T


def _tile_caps(itemsize):
    """Per-dtype tile caps (elements); ~2 MiB per tile for every dtype.

    `tm` is the output-minor (lane/store) axis -> biased larger for long,
    unmasked store bursts.  Both caps are multiples of 128, so any partial
    tile satisfies the (sublane, 128) block constraint for f32/bf16/int8.
    """
    tm_cap = max(128, 4096 // itemsize)   # f32: 1024, bf16: 2048, int8: 4096
    tn_cap = 512
    return tm_cap, tn_cap


def _pick_tile(dim, cap, min_tiles=1):
    """Tile size along one transposed axis.

    Full extent if it fits under `cap` (always a legal block shape, no
    padding); otherwise the 128-aligned cap with a cdiv grid (edge blocks are
    padded/clipped by Pallas).  `min_tiles` optionally shrinks the tile so the
    axis contributes at least that many grid steps (megacore / pipelining).
    """
    if min_tiles > 1 and dim > 128:
        cap = min(cap, max(128, _round_up(_cdiv(dim, min_tiles), 128)))
    return dim if dim <= cap else cap


def _batched_transpose(x3):
    """(B, M, N) -> (B, N, M) via a tiled Pallas TPU kernel."""
    B, M, N = x3.shape
    itemsize = jnp.dtype(x3.dtype).itemsize
    tm_cap, tn_cap = _tile_caps(itemsize)
    tm = _pick_tile(M, tm_cap)
    tn = _pick_tile(N, tn_cap)

    # Guarantee enough parallel grid steps (>= 2 TCs on v7x plus a few for
    # double-buffer pipelining) by splitting the larger transposed axis when
    # the whole problem would otherwise collapse to a single block.
    MIN_STEPS = 4
    steps = B * _cdiv(M, tm) * _cdiv(N, tn)
    if steps < MIN_STEPS:
        if M >= N and M > 128:
            tm = _pick_tile(M, tm_cap,
                            min_tiles=_cdiv(MIN_STEPS, B * _cdiv(N, tn)))
        elif N > 128:
            tn = _pick_tile(N, tn_cap,
                            min_tiles=_cdiv(MIN_STEPS, B * _cdiv(M, tm)))

    # Innermost grid dim (i) varies fastest -> output-minor tiles stream
    # sequentially (lane-dense writeback); input reads are the strided side.
    grid = (B, _cdiv(N, tn), _cdiv(M, tm))

    # Explicit scoped-VMEM budget: double-buffered (in + out) tiles plus
    # generous headroom; robust across v5e/v6e/v7x scoped defaults.
    tile_bytes = tm * tn * itemsize
    vmem_limit = min(max(8 * tile_bytes, 16 << 20), 48 << 20)

    return pl.pallas_call(
        _transpose_kernel,
        out_shape=jax.ShapeDtypeStruct((B, N, M), x3.dtype),
        grid=grid,
        in_specs=[pl.BlockSpec((None, tm, tn), lambda b, j, i: (b, i, j))],
        out_specs=pl.BlockSpec((None, tn, tm), lambda b, j, i: (b, j, i)),
        compiler_params=pltpu.CompilerParams(
            dimension_semantics=("parallel", "parallel", "parallel"),
            vmem_limit_bytes=vmem_limit,
        ),
        cost_estimate=pl.CostEstimate(
            flops=0,
            transcendentals=0,
            bytes_accessed=2 * x3.size * itemsize,
        ),
    )(x3)


# ---------------------------------------------------------------------------
# Permutation canonicalization (pure Python on static shapes).
# ---------------------------------------------------------------------------
def _merge_axes(shape, order):
    """Drop size-1 axes and merge runs of axes that stay adjacent under `order`.

    Returns (merged_input_shape, merged_perm) such that
    transpose(x.reshape(merged_input_shape), merged_perm) has the same
    row-major element order as transpose(x, order).
    """
    keep = [d for d in range(len(shape)) if shape[d] != 1]
    if not keep:
        return (), ()
    new_id = {d: i for i, d in enumerate(keep)}
    red_shape = [shape[d] for d in keep]
    red_order = [new_id[d] for d in order if shape[d] != 1]

    runs = [[red_order[0]]]
    for a in red_order[1:]:
        if a == runs[-1][-1] + 1:
            runs[-1].append(a)
        else:
            runs.append([a])
    runs_sorted = sorted(runs, key=lambda r: r[0])
    merged_shape = tuple(math.prod(red_shape[a] for a in r) for r in runs_sorted)
    run_pos = {tuple(r): i for i, r in enumerate(runs_sorted)}
    merged_perm = tuple(run_pos[tuple(r)] for r in runs)
    return merged_shape, merged_perm


def pallas_permute(x, order):
    """Equivalent of torch.Tensor.permute(*order), data path in Pallas."""
    order = tuple(int(p) for p in order)
    assert len(order) == x.ndim, (order, x.shape)
    assert sorted(order) == list(range(x.ndim)), order
    out_shape = tuple(x.shape[p] for p in order)

    merged_shape, merged_perm = _merge_axes(x.shape, order)
    k = len(merged_perm)

    # Case A: canonical permutation is the identity -> pure metadata reshape
    # (torch.permute is also metadata-only here; a copy kernel would only
    # burn HBM bandwidth).
    if k <= 1 or merged_perm == tuple(range(k)):
        return x.reshape(out_shape)

    # Case B: swap of the last two merged axes -> batched tiled 2-D transpose.
    # This covers all Permute4Batchnorm use cases, e.g. (0,3,1,2), (0,2,3,1),
    # (0,2,1), (1,0), (0,4,1,2,3), ...
    if merged_perm == tuple(range(k - 2)) + (k - 1, k - 2):
        b = math.prod(merged_shape[:-2]) if k > 2 else 1
        m, n = merged_shape[-2], merged_shape[-1]
        y = _batched_transpose(x.reshape(b, m, n))
        return y.reshape(out_shape)

    # TODO(synk): general N-D permutations that do not reduce to a batched
    # last-two-axis transpose (e.g. (0,2,1,3)) are not lowered to Pallas here;
    # fall back to XLA's transpose for those rare orders.
    return jnp.transpose(x, order)


class Permute4Batchnorm:
    """Mirror of the PyTorch module's interface."""

    def __init__(self, order):
        self.order = tuple(order)

    def __call__(self, x):
        assert len(self.order) == len(x.shape)
        return pallas_permute(x, self.order)


if __name__ == "__main__":
    key = jax.random.PRNGKey(0)
    k1, k2, k3 = jax.random.split(key, 3)

    # 1) Typical pre-BatchNorm permute: [A, T, B, D] -> [A, D, T, B]
    x1 = jax.random.normal(k1, (2, 8, 16, 128), dtype=jnp.float32)
    order1 = (0, 3, 1, 2)
    y1 = jax.block_until_ready(Permute4Batchnorm(order1)(x1))
    ref1 = jnp.transpose(x1, order1)
    assert y1.shape == ref1.shape and y1.dtype == ref1.dtype
    assert bool(jnp.all(y1 == ref1))

    # 2) 3-D permute exercising axis merging + the min-grid-steps split.
    x2 = jax.random.normal(k2, (4, 128, 256), dtype=jnp.float32)
    order2 = (2, 0, 1)
    y2 = jax.block_until_ready(Permute4Batchnorm(order2)(x2))
    ref2 = jnp.transpose(x2, order2)
    assert y2.shape == ref2.shape and y2.dtype == ref2.dtype
    assert bool(jnp.all(y2 == ref2))

    # 3) Non-128-multiple dims (ragged cdiv grid, padded edge blocks), bf16.
    x3 = jax.random.normal(k3, (2, 4, 33, 24), dtype=jnp.float32).astype(jnp.bfloat16)
    order3 = (0, 3, 1, 2)
    y3 = jax.block_until_ready(Permute4Batchnorm(order3)(x3))
    ref3 = jnp.transpose(x3, order3)
    assert y3.shape == ref3.shape and y3.dtype == ref3.dtype
    assert bool(jnp.all(y3 == ref3))

    # 4) Identity order -> metadata-only path.
    x4 = jax.random.normal(key, (2, 4, 16, 16), dtype=jnp.float32)
    y4 = jax.block_until_ready(Permute4Batchnorm((0, 1, 2, 3))(x4))
    assert y4.shape == x4.shape and bool(jnp.all(y4 == x4))

    print("KERNEL_OK")
</pallas_src>

<mosaic_0001>
module attributes {stable_mosaic.version = 11 : i64} {
  func.func @_transpose_kernel(%arg0: i32, %arg1: i32, %arg2: i32, %arg3: memref<1x128x128xf32, #tpu.memory_space<vmem>>, %arg4: memref<1x128x128xf32, #tpu.memory_space<vmem>>) attributes {dimension_semantics = [#tpu.dimension_semantics<parallel>, #tpu.dimension_semantics<parallel>, #tpu.dimension_semantics<parallel>], iteration_bounds = array<i64: 2, 1, 1>, scalar_prefetch = 0 : i64, scratch_operands = 0 : i64, tpu.core_type = #tpu.core_type<tc>, window_params = [{transform_indices = @transform_0, window_bounds = array<i64: 1, 128, 128>}, {transform_indices = @transform_1, window_bounds = array<i64: 1, 128, 128>}]} {
    %c0 = arith.constant 0 : index
    %c0_0 = arith.constant 0 : index
    %c0_1 = arith.constant 0 : index
    %0 = vector.load %arg3[%c0, %c0_0, %c0_1] : memref<1x128x128xf32, #tpu.memory_space<vmem>>, vector<1x128x128xf32>
    %1 = vector.shape_cast %0 : vector<1x128x128xf32> to vector<128x128xf32>
    %2 = tpu.transpose %1, [1, 0] : vector<128x128xf32> -> vector<128x128xf32>
    %c0_2 = arith.constant 0 : index
    %c0_3 = arith.constant 0 : index
    %c0_4 = arith.constant 0 : index
    %3 = vector.load %arg4[%c0_2, %c0_3, %c0_4] : memref<1x128x128xf32, #tpu.memory_space<vmem>>, vector<1x128x128xf32>
    %4 = vector.shape_cast %3 : vector<1x128x128xf32> to vector<128x128xf32>
    %5 = vector.shape_cast %2 : vector<128x128xf32> to vector<1x128x128xf32>
    tpu.vector_store %arg4[%c0_2, %c0_3, %c0_4], %5 {strides = array<i32>} : memref<1x128x128xf32, #tpu.memory_space<vmem>>, vector<1x128x128xf32>,
    return
  }
  func.func @transform_0(%arg0: i32, %arg1: i32, %arg2: i32) -> (i32, i32, i32) {
    %c0_i32 = arith.constant 0 : i32
    return %arg0, %arg2, %arg1 : i32, i32, i32
  }
  func.func @transform_1(%arg0: i32, %arg1: i32, %arg2: i32) -> (i32, i32, i32) {
    %c0_i32 = arith.constant 0 : i32
    return %arg0, %arg1, %arg2 : i32, i32, i32
  }
}

</mosaic_0001>

<llo_original>
// kernel: tpu_custom_call.1
$region0: #{tpu_custom_call.1}
  #allocation0 [shape = 'u32[]', space=smem, size = 0x4, offset = 0x4, fixed_abs, tag = 'smem constant byte address 0x4 - core index']
  #allocation1 [shape = 'u32[72,128]{1,0:T(1,128)}', space=vmem, size = 0x9000, scoped, tag = 'internal scratch']
  %s0 = inlined_call_operand.hbm [shape: f32[2,128,128], index: 0, kind: input, shape index: {}]
  %s1 = inlined_call_operand.hbm [shape: f32[2,128,128], index: 1, kind: output, shape index: {}]
  %s2 = sld [smem:[#allocation0]]
  $region41: #{tpu_custom_call.1} parent=0
    _
  %s4 = ssub.s32 1, %s2
  %s5 = scalar_select 0, %s4, %s2
  $region1: #{tpu_custom_call.1} parent=0
    #allocation2 [shape = 'u8[131072]{0}', space=vmem, size = 0x20000, scoped, tag = 'input window, operand 0']
    #allocation3 [shape = 's32[2]{0}', space=sflag, size = 0x8, scoped, tag = 'scoped memory for tpu_custom_call.1']
    #allocation4 [shape = 's32[2]{0}', space=sflag, size = 0x8, scoped, tag = 'scoped memory for tpu_custom_call.1']
    #allocation5 [shape = 'u8[131072]{0}', space=vmem, size = 0x20000, scoped, tag = 'output window, operand 0']
    %6 = vsyncpa [#allocation3], 0
    %s7 = scalar_lea.sflag [#allocation3], 1
    %8 = vsyncpa %s7, 0
    %9 = vsyncpa [#allocation4], 0
    %s10 = scalar_lea.sflag [#allocation4], 1
    %11 = vsyncpa %s10, 0
    loop: start=0, step=1, limit=4
    $region2: #{tpu_custom_call.1} parent=1 // loop_pre_header
      _
    $region3: #{tpu_custom_call.1} parent=1 // loop_header
      %s13 = sphi 0, %s17
      %p14 = scmp.ge.s32.totalorder %s13, 4
      %s20 = sphi 0, %s39
      %s21 = sphi 0, %s35
      %s22 = sphi 0, %s31
      %s23 = sphi 0, %s20
      %s24 = sphi 0, %s21
      %s25 = sphi 0, %s22
      %s26 = sphi 0, %s23
      %s27 = sphi 0, %s24
      %s28 = sphi 0, %s25
      %s46 = sphi 0, %s48
      %s49 = sphi 0, %s46
      %s50 = sphi 0, %s49
      %s66 = sphi 0, %s50
      %s76 = sphi 0, %s78
      %s79 = sphi 0, %s76
      %s80 = sphi 0, %s79
      %s96 = sphi 0, %s80
    $region4: #{tpu_custom_call.1} parent=1 // loop_header_branch
      %16 = sbr.rel (%p14) target = $region8
    $region5: #{tpu_custom_call.1} parent=1 // loop_body
      %s18 = ssub.s32 %s13, 1
      %s19 = ssub.s32 %s13, 2
      %s29 = sadd.s32 1, %s22
      %p30 = scmp.ge.s32.totalorder %s29, 1
      %s31 = scalar_select %p30, 0, %s29
      %s32 = sadd.s32 1, %s21
      %s33 = scalar_select %p30, %s32, %s21
      %p34 = scmp.ge.s32.totalorder %s33, 1
      %s35 = scalar_select %p34, 0, %s33
      %s36 = sadd.s32 1, %s20
      %s37 = scalar_select %p34, %s36, %s20
      %p38 = scmp.ge.s32.totalorder %s37, 2
      %s39 = scalar_select %p38, 0, %s37
      %s40 = ssub.s32 %s20, %s39
      %s41 = ssub.s32 %s22, %s31
      %s42 = sor.u32 %s40, %s41
      %s43 = ssub.s32 %s21, %s35
      %s44 = sor.u32 %s42, %s43
      %p45 = scmp.eq.s32.totalorder %s44, 0
      %s47 = sadd.s32 %s46, 1
      %s48 = scalar_select %p45, %s46, %s47
      %p51 = pneg %p45
      %p52 = scmp.eq.s32.totalorder %s13, 1
      %p53 = por %p51, %p52
      %p54 = scmp.ne.s32.totalorder %s46, %s49
      %p55 = scmp.eq.s32.totalorder %s13, 0
      %p56 = por %p54, %p55
      %p57 = scmp.ne.s32.totalorder %s46, %s49
      %p58 = scmp.eq.s32.totalorder %s18, 1
      %p59 = por %p57, %p58
      %p60 = scmp.ne.s32.totalorder %s49, %s50
      %p61 = scmp.eq.s32.totalorder %s18, 0
      %p62 = por %p60, %p61
      %p63 = scmp.ne.s32.totalorder %s49, %s50
      %p64 = scmp.eq.s32.totalorder %s19, 1
      %p65 = por %p63, %p64
      %p67 = scmp.ne.s32.totalorder %s50, %s66
      %p68 = scmp.eq.s32.totalorder %s19, 0
      %p69 = por %p67, %p68
      %s70 = ssub.s32 %s20, %s39
      %s71 = ssub.s32 %s21, %s35
      %s72 = sor.u32 %s70, %s71
      %s73 = ssub.s32 %s22, %s31
      %s74 = sor.u32 %s72, %s73
      %p75 = scmp.eq.s32.totalorder %s74, 0
      %s77 = sadd.s32 %s76, 1
      %s78 = scalar_select %p75, %s76, %s77
      %p81 = pneg %p75
      %p82 = scmp.eq.s32.totalorder %s13, 1
      %p83 = por %p81, %p82
      %p84 = scmp.ne.s32.totalorder %s76, %s79
      %p85 = scmp.eq.s32.totalorder %s13, 0
      %p86 = por %p84, %p85
      %p87 = scmp.ne.s32.totalorder %s76, %s79
      %p88 = scmp.eq.s32.totalorder %s18, 1
      %p89 = por %p87, %p88
      %p90 = scmp.ne.s32.totalorder %s79, %s80
      %p91 = scmp.eq.s32.totalorder %s18, 0
      %p92 = por %p90, %p91
      %p93 = scmp.ne.s32.totalorder %s79, %s80
      %p94 = scmp.eq.s32.totalorder %s19, 1
      %p95 = por %p93, %p94
      %p97 = scmp.ne.s32.totalorder %s80, %s96
      %p98 = scmp.eq.s32.totalorder %s19, 0
      %p99 = por %p97, %p98
      %p100 = scmp.le.s32.totalorder 1, %s13
      %p101 = scmp.lt.s32.totalorder %s13, 3
      %p102 = pnand %p100, %p101
      %p103 = pneg %p102
      // Predicated region
      $region9: #{tpu_custom_call.1} parent=5 // pred_check
        _
      $region10: #{tpu_custom_call.1} parent=5 // pred_check_branch
        %105 = sbr.rel (%p102) target = $region12
      $region11: #{tpu_custom_call.1} parent=5 // pred_region
        %s106 = ssub.s32 %s13, 1
      $region12: #{tpu_custom_call.1} parent=5 // pred_fallthru
        _
      %p107 = scmp.lt.s32.totalorder %s13, 2
      // Predicated region
      $region13: #{tpu_custom_call.1} parent=5 // pred_check
        %p108 = pneg %p107
      $region14: #{tpu_custom_call.1} parent=5 // pred_check_branch
        %110 = sbr.rel (%p108) target = $region16
      $region15: #{tpu_custom_call.1} parent=5 // pred_region
        // Predicated region
        $region17: #{tpu_custom_call.1} parent=15 // pred_check
          %p111 = pneg %p56
        $region18: #{tpu_custom_call.1} parent=15 // pred_check_branch
          %113 = sbr.rel (%p111) target = $region20
        $region19: #{tpu_custom_call.1} parent=15 // pred_region
          %s114 = sand.u32 %s46, 1
          %s115 = scalar_lea.sflag [#allocation3], %s114
          %s116 = sand.u32 %s46, 1
          %s117 = smul.addr %s116, 128
          %s118 = scalar_lea.vmem [#allocation2], %s117
          %s119 = smul.u32 16, %s22
          %121 = vsyncadd %s115, 0
          %s122 = sadd.s32 %s21, %s119
          %s123 = smul.addr %s20, 16
          %s124 = sadd.s32 %s122, %s123
          %s125 = smul.addr %s124, 8
          %s126 = scalar_lea.hbm %s0, %s125
          %s127 = sshll.u32 %s126, 4
          %s128 = int_to_ptr.hbm [resolvable:$true] %s127
          %s129 = sshll.u32 %s118, 4
          %s130 = int_to_ptr.vmem [resolvable:$true] %s129
          %135 = dma.hbm_to_vmem [thread:$0]  %s128, 2048, %s130, %s115, 128, 128, 8
        $region20: #{tpu_custom_call.1} parent=15 // pred_fallthru
          _
      $region16: #{tpu_custom_call.1} parent=5 // pred_fallthru
        _
      %p136 = scmp.le.s32.totalorder 1, %s13
      %p137 = scmp.lt.s32.totalorder %s13, 3
      %p138 = pnand %p136, %p137
      %p139 = pneg %p138
      // Predicated region
      $region21: #{tpu_custom_call.1} parent=5 // pred_check
        _
      $region22: #{tpu_custom_call.1} parent=5 // pred_check_branch
        %141 = sbr.rel (%p138) target = $region24
      $region23: #{tpu_custom_call.1} parent=5 // pred_region
        %s142 = ssub.s32 %s13, 1
        %s143 = sand.u32 %s49, 1
        %s144 = scalar_lea.sflag [#allocation3], %s143
        %s145 = sand.u32 %s49, 1
        %s146 = smul.addr %s145, 128
        %s147 = scalar_lea.vmem [#allocation2], %s146
        // Predicated region
        $region25: #{tpu_custom_call.1} parent=23 // pred_check
          %p148 = pneg %p62
        $region26: #{tpu_custom_call.1} parent=23 // pred_check_branch
          %150 = sbr.rel (%p148) target = $region28
        $region27: #{tpu_custom_call.1} parent=23 // pred_region
          %152 = dma.done %s144, 2048
        $region28: #{tpu_custom_call.1} parent=23 // pred_fallthru
          _
        %s153 = sand.u32 %s49, 1
        %s154 = scalar_lea.sflag [#allocation3], %s153
        %s155 = sand.u32 %s49, 1
        %s156 = smul.addr %s155, 128
        %s157 = scalar_lea.vmem [#allocation2], %s156
        %p158 = pneg %p62
        %p159 = pneg %p59
        %p160 = pneg %p92
        %p161 = pneg %p89
        %s162 = sand.u32 %s79, 1
        %s163 = scalar_lea.sflag [#allocation4], %s162
        %s164 = sand.u32 %s79, 1
        %s165 = smul.addr %s164, 128
        %s166 = scalar_lea.vmem [#allocation5], %s165
        %s167 = smul.u32 16, %s25
        %s168 = smul.u32 16, %s24
        %v169 = vld [vmem:[%s147] sm:$0xff]
        %v170 = vld [vmem:[%s147 + $0x8] sm:$0xff]
        %v171 = vld [vmem:[%s147 + $0x10] sm:$0xff]
        %v172 = vld [vmem:[%s147 + $0x18] sm:$0xff]
        %v173 = vld [vmem:[%s147 + $0x20] sm:$0xff]
        %v174 = vld [vmem:[%s147 + $0x28] sm:$0xff]
        %v175 = vld [vmem:[%s147 + $0x30] sm:$0xff]
        %v176 = vld [vmem:[%s147 + $0x38] sm:$0xff]
        %v177 = vld [vmem:[%s147 + $0x40] sm:$0xff]
        %v178 = vld [vmem:[%s147 + $0x48] sm:$0xff]
        %v179 = vld [vmem:[%s147 + $0x50] sm:$0xff]
        %v180 = vld [vmem:[%s147 + $0x58] sm:$0xff]
        %v181 = vld [vmem:[%s147 + $0x60] sm:$0xff]
        %v182 = vld [vmem:[%s147 + $0x68] sm:$0xff]
        %v183 = vld [vmem:[%s147 + $0x70] sm:$0xff]
        %v184 = vld [vmem:[%s147 + $0x78] sm:$0xff]
        %185 = vxpose.xlu0.b32.start [1/16] %v169, 128
        %186 = vxpose.xlu0.b32.cont [2/16] %v170, 128
        %187 = vxpose.xlu0.b32.cont [3/16] %v171, 128
        %188 = vxpose.xlu0.b32.cont [4/16] %v172, 128
        %189 = vxpose.xlu0.b32.cont [5/16] %v173, 128
        %190 = vxpose.xlu0.b32.cont [6/16] %v174, 128
        %191 = vxpose.xlu0.b32.cont [7/16] %v175, 128
        %192 = vxpose.xlu0.b32.cont [8/16] %v176, 128
        %193 = vxpose.xlu0.b32.cont [9/16] %v177, 128
        %194 = vxpose.xlu0.b32.cont [10/16] %v178, 128
        %195 = vxpose.xlu0.b32.cont [11/16] %v179, 128
        %196 = vxpose.xlu0.b32.cont [12/16] %v180, 128
        %197 = vxpose.xlu0.b32.cont [13/16] %v181, 128
        %198 = vxpose.xlu0.b32.cont [14/16] %v182, 128
        %199 = vxpose.xlu0.b32.cont [15/16] %v183, 128
        %200 = vxpose.xlu0.b32.end [16/16] %v184, 128
        %v201 = vpop.trf.xlu0
        %v202 = vpop.trf.xlu0
        %v203 = vpop.trf.xlu0
        %v204 = vpop.trf.xlu0
        %v205 = vpop.trf.xlu0
        %v206 = vpop.trf.xlu0
        %v207 = vpop.trf.xlu0
        %v208 = vpop.trf.xlu0
        %v209 = vpop.trf.xlu0
        %v210 = vpop.trf.xlu0
        %v211 = vpop.trf.xlu0
        %v212 = vpop.trf.xlu0
        %v213 = vpop.trf.xlu0
        %v214 = vpop.trf.xlu0
        %v215 = vpop.trf.xlu0
        %v216 = vpop.trf.xlu0
        %217 = vst [vmem:[%s166] sm:$0xff] %v201
        %218 = vst [vmem:[%s166 + $0x8] sm:$0xff] %v202
        %219 = vst [vmem:[%s166 + $0x10] sm:$0xff] %v203
        %220 = vst [vmem:[%s166 + $0x18] sm:$0xff] %v204
        %221 = vst [vmem:[%s166 + $0x20] sm:$0xff] %v205
        %222 = vst [vmem:[%s166 + $0x28] sm:$0xff] %v206
        %223 = vst [vmem:[%s166 + $0x30] sm:$0xff] %v207
        %224 = vst [vmem:[%s166 + $0x38] sm:$0xff] %v208
        %225 = vst [vmem:[%s166 + $0x40] sm:$0xff] %v209
        %226 = vst [vmem:[%s166 + $0x48] sm:$0xff] %v210
        %227 = vst [vmem:[%s166 + $0x50] sm:$0xff] %v211
        %228 = vst [vmem:[%s166 + $0x58] sm:$0xff] %v212
        %229 = vst [vmem:[%s166 + $0x60] sm:$0xff] %v213
        %230 = vst [vmem:[%s166 + $0x68] sm:$0xff] %v214
        %231 = vst [vmem:[%s166 + $0x70] sm:$0xff] %v215
        %232 = vst [vmem:[%s166 + $0x78] sm:$0xff] %v216
        %s233 = sand.u32 %s79, 1
        %s234 = scalar_lea.sflag [#allocation4], %s233
        %s235 = sand.u32 %s79, 1
        %s236 = smul.addr %s235, 128
        %s237 = scalar_lea.vmem [#allocation5], %s236
        // Predicated region
        $region29: #{tpu_custom_call.1} parent=23 // pred_check
          %p238 = pneg %p89
        $region30: #{tpu_custom_call.1} parent=23 // pred_check_branch
          %240 = sbr.rel (%p238) target = $region32
        $region31: #{tpu_custom_call.1} parent=23 // pred_region
          %s241 = smul.u32 16, %s24
          %243 = vsyncadd %s234, 0
          %s244 = sadd.s32 %s25, %s241
          %s245 = smul.addr %s23, 16
          %s246 = sadd.s32 %s244, %s245
          %s247 = smul.addr %s246, 8
          %s248 = scalar_lea.hbm %s1, %s247
          %s249 = sshll.u32 %s237, 4
          %s250 = int_to_ptr.vmem [resolvable:$true] %s249
          %s251 = sshll.u32 %s248, 4
          %s252 = int_to_ptr.hbm [resolvable:$true] %s251
          %257 = dma.vmem_to_hbm [thread:$0]  %s250, 2048, %s252, %s234, 128, 128, 8
        $region32: #{tpu_custom_call.1} parent=23 // pred_fallthru
          _
      $region24: #{tpu_custom_call.1} parent=5 // pred_fallthru
        _
      %p258 = scmp.le.s32.totalorder 2, %s13
      // Predicated region
      $region33: #{tpu_custom_call.1} parent=5 // pred_check
        %p259 = pneg %p258
      $region34: #{tpu_custom_call.1} parent=5 // pred_check_branch
        %261 = sbr.rel (%p259) target = $region36
      $region35: #{tpu_custom_call.1} parent=5 // pred_region
        %s262 = ssub.s32 %s13, 2
        // Predicated region
        $region37: #{tpu_custom_call.1} parent=35 // pred_check
          %p263 = pneg %p95
        $region38: #{tpu_custom_call.1} parent=35 // pred_check_branch
          %265 = sbr.rel (%p263) target = $region40
        $region39: #{tpu_custom_call.1} parent=35 // pred_region
          %s266 = sand.u32 %s80, 1
          %s267 = scalar_lea.sflag [#allocation4], %s266
          %s268 = sand.u32 %s80, 1
          %s269 = smul.addr %s268, 128
          %s270 = scalar_lea.vmem [#allocation5], %s269
          %272 = dma.done %s267, 2048
        $region40: #{tpu_custom_call.1} parent=35 // pred_fallthru
          _
      $region36: #{tpu_custom_call.1} parent=5 // pred_fallthru
        _
    $region6: #{tpu_custom_call.1} parent=1 // loop_footer
      %s17 = sadd.s32 1, %s13
    $region7: #{tpu_custom_call.1} parent=1 // loop_footer_branch
      %12 = sbr.rel target = $region3
    $region8: #{tpu_custom_call.1} parent=1 // loop_exit
      _
    %273 = vsyncpa [#allocation3], 1
    %s274 = scalar_lea.sflag [#allocation3], 1
    %275 = vsyncpa %s274, 1
    %276 = vsyncpa [#allocation4], 1
    %s277 = scalar_lea.sflag [#allocation4], 1
    %278 = vsyncpa %s277, 1

</llo_original>
